<compile_context>
chip_gen: v5e
topology: v5e:2x2
jax: 0.10.0
libtpu: 0.0.40
codegen_flags: <defaults>
</compile_context>

<pallas_src>
import functools
import math

import jax
import jax.numpy as jnp
from jax.experimental import pallas as pl
from jax.experimental.pallas import tpu as pltpu


def lstm_fused_kernel(x_ref, wx_ref, wh_ref, b_ref, wd_ref, bd_ref,
                      out_ref, gx_ref, hs_ref, *, seq_len, batch):
    """Single-invocation fused LSTM forward.

    x_ref : (T*B, E)  time-major flattened embedded inputs (row = t*B + b)
    gx_ref: (T*B, 4H) VMEM scratch, precomputed input-gate projections
    hs_ref: (T*B, H)  VMEM scratch, hidden states for the batched decoder
    out_ref: (T*B, O) decoded outputs (time-major flattened)
    Gate order matches the module: [forget, input, cell, output].
    """
    H = wh_ref.shape[0]
    T, B = seq_len, batch

    # ---- Phase 1 (parallel): hoisted input projection, one big MXU matmul. ----
    gx_ref[...] = (
        jnp.dot(x_ref[...], wx_ref[...], preferred_element_type=jnp.float32)
        + b_ref[...]
    )

    # ---- Phase 2 (sequential): recurrence; only h @ Wh on the critical path. ----
    c = jnp.zeros((B, H), jnp.float32)
    h = jnp.zeros((B, H), jnp.float32)
    for t in range(T):  # small static T -> fully unrolled, static indices
        row = t * B
        gates = gx_ref[pl.ds(row, B), :] + jnp.dot(
            h, wh_ref[...], preferred_element_type=jnp.float32)

        # Full-width nonlinearities over the whole (B, 4H) gate vreg (EUP), then slice.
        sg = jax.nn.sigmoid(gates)
        tg = jnp.tanh(gates)
        f_g = sg[:, 0 * H:1 * H]
        i_g = sg[:, 1 * H:2 * H]
        g_g = tg[:, 2 * H:3 * H]
        o_g = sg[:, 3 * H:4 * H]

        c = f_g * c + i_g * g_g
        h = o_g * jnp.tanh(c)
        hs_ref[pl.ds(row, B), :] = h

    # ---- Phase 3 (parallel): hoisted, batched decoder (dropout == identity, eval). ----
    out_ref[...] = (
        jnp.dot(hs_ref[...], wd_ref[...], preferred_element_type=jnp.float32)
        + bd_ref[...]
    ).astype(out_ref.dtype)


def lstm_forward(tokens, params):
    """tokens: (B, T) int32. Returns (B, T, output_size) float32."""
    emb = params["embedding"]           # (V, E)
    wx = params["wx_t"]                 # (E, 4H)
    wh = params["wh_t"]                 # (H, 4H)
    b = params["b_gates"]               # (1, 4H)  (b_x2h + b_h2h, folded once)
    wd = params["wd_t"]                 # (H, O)
    bd = params["bd"]                   # (1, O)

    B, T = tokens.shape
    E = emb.shape[1]
    H = wh.shape[0]
    O = wd.shape[1]

    # Embedding gather stays in plain JAX (glue); gather directly in time-major order
    # and flatten to (T*B, E) so the kernel never touches 3-D layouts.
    x_emb_flat = emb[tokens.T].astype(jnp.float32).reshape(T * B, E)

    out_flat = pl.pallas_call(
        functools.partial(lstm_fused_kernel, seq_len=T, batch=B),
        out_shape=jax.ShapeDtypeStruct((T * B, O), jnp.float32),
        grid_spec=pltpu.PrefetchScalarGridSpec(
            num_scalar_prefetch=0,
            grid=(1,),                                       # single invocation
            in_specs=[
                pl.BlockSpec((T * B, E), lambda i: (0, 0)),  # x (time-major, flattened)
                pl.BlockSpec((E, 4 * H), lambda i: (0, 0)),  # Wx^T
                pl.BlockSpec((H, 4 * H), lambda i: (0, 0)),  # Wh^T
                pl.BlockSpec((1, 4 * H), lambda i: (0, 0)),  # combined gate bias
                pl.BlockSpec((H, O), lambda i: (0, 0)),      # Wd^T
                pl.BlockSpec((1, O), lambda i: (0, 0)),      # bd
            ],
            out_specs=pl.BlockSpec((T * B, O), lambda i: (0, 0)),
            scratch_shapes=[
                pltpu.VMEM((T * B, 4 * H), jnp.float32),     # gates_x slab
                pltpu.VMEM((T * B, H), jnp.float32),         # hidden-state slab
            ],
        ),
        compiler_params=pltpu.CompilerParams(
            dimension_semantics=("arbitrary",),
        ),
    )(x_emb_flat, wx, wh, b, wd, bd)

    # (T*B, O) -> (B, T, O)  (tiny XLA reshuffle in the wrapper)
    return jnp.transpose(out_flat.reshape(T, B, O), (1, 0, 2))


def xavier_uniform(key, shape_out_in):
    """Matches nn.init.xavier_uniform_ on a torch Linear weight (out, in)."""
    fan_out, fan_in = shape_out_in
    bound = math.sqrt(6.0 / (fan_in + fan_out))
    return jax.random.uniform(key, shape_out_in, jnp.float32, -bound, bound)


def init_params(key, vocab, E, H, O):
    k_emb, k_x2h, k_h2h, k_dec = jax.random.split(key, 4)
    # Embedding: torch default N(0, 1)
    embedding = jax.random.normal(k_emb, (vocab, E), jnp.float32)
    # All Linear layers: xavier_uniform weight, zero bias (module's _init_weights).
    w_x2h = xavier_uniform(k_x2h, (4 * H, E))      # torch weight layout (out, in)
    w_h2h = xavier_uniform(k_h2h, (4 * H, H))
    w_dec = xavier_uniform(k_dec, (O, H))
    return {
        "embedding": embedding,
        "wx_t": w_x2h.T,                                # (E, 4H)
        "wh_t": w_h2h.T,                                # (H, 4H)
        "b_gates": jnp.zeros((1, 4 * H), jnp.float32),  # b_x2h + b_h2h (both zero)
        "wd_t": w_dec.T,                                # (H, O)
        "bd": jnp.zeros((1, O), jnp.float32),
    }


def lstm_reference(tokens, params):
    """Pure-JAX reference matching the PyTorch forward (eval mode)."""
    emb = params["embedding"][tokens]               # (B, T, E)
    B, T, _ = emb.shape
    H = params["wh_t"].shape[0]
    c = jnp.zeros((B, H), jnp.float32)
    h = jnp.zeros((B, H), jnp.float32)
    outs = []
    for t in range(T):
        gates = emb[:, t, :] @ params["wx_t"] + h @ params["wh_t"] + params["b_gates"]
        f, i, g, o = jnp.split(gates, 4, axis=1)
        f, i, g, o = jax.nn.sigmoid(f), jax.nn.sigmoid(i), jnp.tanh(g), jax.nn.sigmoid(o)
        c = f * c + i * g
        h = o * jnp.tanh(c)
        outs.append(h)
    outs = jnp.stack(outs, axis=1)                  # (B, T, H)
    return outs @ params["wd_t"] + params["bd"]     # (B, T, O)


if __name__ == "__main__":
    VOCAB, E, H, O = 50, 32, 32, 16
    B, T = 8, 8

    key = jax.random.PRNGKey(0)
    k_params, k_tokens = jax.random.split(key)
    params = init_params(k_params, VOCAB, E, H, O)
    tokens = jax.random.randint(k_tokens, (B, T), 0, VOCAB, dtype=jnp.int32)

    out = jax.block_until_ready(lstm_forward(tokens, params))
    ref = jax.block_until_ready(lstm_reference(tokens, params))

    assert out.shape == (B, T, O), out.shape
    assert jnp.allclose(out, ref, atol=1e-4, rtol=1e-4), float(jnp.max(jnp.abs(out - ref)))
    print("KERNEL_OK")
</pallas_src>

<mosaic_0001>
module attributes {stable_mosaic.version = 11 : i64} {
  func.func @lstm_fused_kernel(%arg0: i32, %arg1: memref<64x32xf32, #tpu.memory_space<vmem>>, %arg2: memref<32x128xf32, #tpu.memory_space<vmem>>, %arg3: memref<32x128xf32, #tpu.memory_space<vmem>>, %arg4: memref<1x128xf32, #tpu.memory_space<vmem>>, %arg5: memref<32x16xf32, #tpu.memory_space<vmem>>, %arg6: memref<1x16xf32, #tpu.memory_space<vmem>>, %arg7: memref<64x16xf32, #tpu.memory_space<vmem>>, %arg8: memref<64x128xf32, #tpu.memory_space<vmem>>, %arg9: memref<64x32xf32, #tpu.memory_space<vmem>>) attributes {dimension_semantics = [#tpu.dimension_semantics<arbitrary>], iteration_bounds = array<i64: 1>, scalar_prefetch = 0 : i64, scratch_operands = 2 : i64, tpu.core_type = #tpu.core_type<tc>, window_params = [{pipeline_mode = #tpu.pipeline_mode<synchronous>, transform_indices = @transform_0, window_bounds = array<i64: 64, 32>}, {pipeline_mode = #tpu.pipeline_mode<synchronous>, transform_indices = @transform_1, window_bounds = array<i64: 32, 128>}, {pipeline_mode = #tpu.pipeline_mode<synchronous>, transform_indices = @transform_2, window_bounds = array<i64: 32, 128>}, {pipeline_mode = #tpu.pipeline_mode<synchronous>, transform_indices = @transform_3, window_bounds = array<i64: 1, 128>}, {pipeline_mode = #tpu.pipeline_mode<synchronous>, transform_indices = @transform_4, window_bounds = array<i64: 32, 16>}, {pipeline_mode = #tpu.pipeline_mode<synchronous>, transform_indices = @transform_5, window_bounds = array<i64: 1, 16>}, {pipeline_mode = #tpu.pipeline_mode<synchronous>, transform_indices = @transform_6, window_bounds = array<i64: 64, 16>}]} {
    %c0 = arith.constant 0 : index
    %c0_0 = arith.constant 0 : index
    %0 = vector.load %arg1[%c0, %c0_0] : memref<64x32xf32, #tpu.memory_space<vmem>>, vector<64x32xf32>
    %c0_1 = arith.constant 0 : index
    %c0_2 = arith.constant 0 : index
    %1 = vector.load %arg2[%c0_1, %c0_2] : memref<32x128xf32, #tpu.memory_space<vmem>>, vector<32x128xf32>
    %cst = arith.constant dense<0.000000e+00> : vector<64x128xf32>
    %2 = tpu.matmul %0, %1, %cst {dimension_numbers = #tpu.dot_dimension_numbers<[1], [0], [0], [1], [0, 0, 1, 1], [], []>} : vector<64x32xf32>, vector<32x128xf32>, vector<64x128xf32> -> vector<64x128xf32>
    %c0_3 = arith.constant 0 : index
    %c0_4 = arith.constant 0 : index
    %3 = vector.load %arg4[%c0_3, %c0_4] : memref<1x128xf32, #tpu.memory_space<vmem>>, vector<1x128xf32>
    %4 = vector.broadcast %3 : vector<1x128xf32> to vector<64x128xf32>
    %5 = arith.addf %2, %4 : vector<64x128xf32>
    %c0_5 = arith.constant 0 : index
    %c0_6 = arith.constant 0 : index
    %6 = vector.load %arg8[%c0_5, %c0_6] : memref<64x128xf32, #tpu.memory_space<vmem>>, vector<64x128xf32>
    tpu.vector_store %arg8[%c0_5, %c0_6], %5 {strides = array<i32>} : memref<64x128xf32, #tpu.memory_space<vmem>>, vector<64x128xf32>,
    %cst_7 = arith.constant 0.000000e+00 : f32
    %7 = vector.broadcast %cst_7 : f32 to vector<8x32xf32>
    %cst_8 = arith.constant 0.000000e+00 : f32
    %8 = vector.broadcast %cst_8 : f32 to vector<8x32xf32>
    %c0_9 = arith.constant 0 : index
    %c0_10 = arith.constant 0 : index
    %9 = vector.load %arg8[%c0_9, %c0_10] : memref<64x128xf32, #tpu.memory_space<vmem>>, vector<8x128xf32>
    %c0_11 = arith.constant 0 : index
    %c0_12 = arith.constant 0 : index
    %10 = vector.load %arg3[%c0_11, %c0_12] : memref<32x128xf32, #tpu.memory_space<vmem>>, vector<32x128xf32>
    %cst_13 = arith.constant dense<0.000000e+00> : vector<8x128xf32>
    %11 = tpu.matmul %8, %10, %cst_13 {dimension_numbers = #tpu.dot_dimension_numbers<[1], [0], [0], [1], [0, 0, 1, 1], [], []>} : vector<8x32xf32>, vector<32x128xf32>, vector<8x128xf32> -> vector<8x128xf32>
    %12 = arith.addf %9, %11 : vector<8x128xf32>
    %13 = arith.negf %12 : vector<8x128xf32>
    %14 = math.exp %13 : vector<8x128xf32>
    %cst_14 = arith.constant 1.000000e+00 : f32
    %15 = vector.broadcast %cst_14 : f32 to vector<8x128xf32>
    %16 = arith.addf %15, %14 : vector<8x128xf32>
    %17 = arith.divf %15, %16 : vector<8x128xf32>
    %18 = math.tanh %12 : vector<8x128xf32>
    %19 = vector.extract_strided_slice %17 {offsets = [0, 0], sizes = [8, 32], strides = [1, 1]} : vector<8x128xf32> to vector<8x32xf32>
    %20 = vector.extract_strided_slice %17 {offsets = [0, 32], sizes = [8, 32], strides = [1, 1]} : vector<8x128xf32> to vector<8x32xf32>
    %21 = vector.extract_strided_slice %18 {offsets = [0, 64], sizes = [8, 32], strides = [1, 1]} : vector<8x128xf32> to vector<8x32xf32>
    %22 = vector.extract_strided_slice %17 {offsets = [0, 96], sizes = [8, 32], strides = [1, 1]} : vector<8x128xf32> to vector<8x32xf32>
    %23 = arith.mulf %19, %7 : vector<8x32xf32>
    %24 = arith.mulf %20, %21 : vector<8x32xf32>
    %25 = arith.addf %23, %24 : vector<8x32xf32>
    %26 = math.tanh %25 : vector<8x32xf32>
    %27 = arith.mulf %22, %26 : vector<8x32xf32>
    %c0_15 = arith.constant 0 : index
    %c0_16 = arith.constant 0 : index
    %28 = vector.load %arg9[%c0_15, %c0_16] : memref<64x32xf32, #tpu.memory_space<vmem>>, vector<8x32xf32>
    tpu.vector_store %arg9[%c0_15, %c0_16], %27 {strides = array<i32>} : memref<64x32xf32, #tpu.memory_space<vmem>>, vector<8x32xf32>,
    %c8 = arith.constant 8 : index
    %c0_17 = arith.constant 0 : index
    %29 = vector.load %arg8[%c8, %c0_17] : memref<64x128xf32, #tpu.memory_space<vmem>>, vector<8x128xf32>
    %c0_18 = arith.constant 0 : index
    %c0_19 = arith.constant 0 : index
    %30 = vector.load %arg3[%c0_18, %c0_19] : memref<32x128xf32, #tpu.memory_space<vmem>>, vector<32x128xf32>
    %cst_20 = arith.constant dense<0.000000e+00> : vector<8x128xf32>
    %31 = tpu.matmul %27, %30, %cst_20 {dimension_numbers = #tpu.dot_dimension_numbers<[1], [0], [0], [1], [0, 0, 1, 1], [], []>} : vector<8x32xf32>, vector<32x128xf32>, vector<8x128xf32> -> vector<8x128xf32>
    %32 = arith.addf %29, %31 : vector<8x128xf32>
    %33 = arith.negf %32 : vector<8x128xf32>
    %34 = math.exp %33 : vector<8x128xf32>
    %cst_21 = arith.constant 1.000000e+00 : f32
    %35 = vector.broadcast %cst_21 : f32 to vector<8x128xf32>
    %36 = arith.addf %35, %34 : vector<8x128xf32>
    %37 = arith.divf %35, %36 : vector<8x128xf32>
    %38 = math.tanh %32 : vector<8x128xf32>
    %39 = vector.extract_strided_slice %37 {offsets = [0, 0], sizes = [8, 32], strides = [1, 1]} : vector<8x128xf32> to vector<8x32xf32>
    %40 = vector.extract_strided_slice %37 {offsets = [0, 32], sizes = [8, 32], strides = [1, 1]} : vector<8x128xf32> to vector<8x32xf32>
    %41 = vector.extract_strided_slice %38 {offsets = [0, 64], sizes = [8, 32], strides = [1, 1]} : vector<8x128xf32> to vector<8x32xf32>
    %42 = vector.extract_strided_slice %37 {offsets = [0, 96], sizes = [8, 32], strides = [1, 1]} : vector<8x128xf32> to vector<8x32xf32>
    %43 = arith.mulf %39, %25 : vector<8x32xf32>
    %44 = arith.mulf %40, %41 : vector<8x32xf32>
    %45 = arith.addf %43, %44 : vector<8x32xf32>
    %46 = math.tanh %45 : vector<8x32xf32>
    %47 = arith.mulf %42, %46 : vector<8x32xf32>
    %c8_22 = arith.constant 8 : index
    %c0_23 = arith.constant 0 : index
    %48 = vector.load %arg9[%c8_22, %c0_23] : memref<64x32xf32, #tpu.memory_space<vmem>>, vector<8x32xf32>
    tpu.vector_store %arg9[%c8_22, %c0_23], %47 {strides = array<i32>} : memref<64x32xf32, #tpu.memory_space<vmem>>, vector<8x32xf32>,
    %c16 = arith.constant 16 : index
    %c0_24 = arith.constant 0 : index
    %49 = vector.load %arg8[%c16, %c0_24] : memref<64x128xf32, #tpu.memory_space<vmem>>, vector<8x128xf32>
    %c0_25 = arith.constant 0 : index
    %c0_26 = arith.constant 0 : index
    %50 = vector.load %arg3[%c0_25, %c0_26] : memref<32x128xf32, #tpu.memory_space<vmem>>, vector<32x128xf32>
    %cst_27 = arith.constant dense<0.000000e+00> : vector<8x128xf32>
    %51 = tpu.matmul %47, %50, %cst_27 {dimension_numbers = #tpu.dot_dimension_numbers<[1], [0], [0], [1], [0, 0, 1, 1], [], []>} : vector<8x32xf32>, vector<32x128xf32>, vector<8x128xf32> -> vector<8x128xf32>
    %52 = arith.addf %49, %51 : vector<8x128xf32>
    %53 = arith.negf %52 : vector<8x128xf32>
    %54 = math.exp %53 : vector<8x128xf32>
    %cst_28 = arith.constant 1.000000e+00 : f32
    %55 = vector.broadcast %cst_28 : f32 to vector<8x128xf32>
    %56 = arith.addf %55, %54 : vector<8x128xf32>
    %57 = arith.divf %55, %56 : vector<8x128xf32>
    %58 = math.tanh %52 : vector<8x128xf32>
    %59 = vector.extract_strided_slice %57 {offsets = [0, 0], sizes = [8, 32], strides = [1, 1]} : vector<8x128xf32> to vector<8x32xf32>
    %60 = vector.extract_strided_slice %57 {offsets = [0, 32], sizes = [8, 32], strides = [1, 1]} : vector<8x128xf32> to vector<8x32xf32>
    %61 = vector.extract_strided_slice %58 {offsets = [0, 64], sizes = [8, 32], strides = [1, 1]} : vector<8x128xf32> to vector<8x32xf32>
    %62 = vector.extract_strided_slice %57 {offsets = [0, 96], sizes = [8, 32], strides = [1, 1]} : vector<8x128xf32> to vector<8x32xf32>
    %63 = arith.mulf %59, %45 : vector<8x32xf32>
    %64 = arith.mulf %60, %61 : vector<8x32xf32>
    %65 = arith.addf %63, %64 : vector<8x32xf32>
    %66 = math.tanh %65 : vector<8x32xf32>
    %67 = arith.mulf %62, %66 : vector<8x32xf32>
    %c16_29 = arith.constant 16 : index
    %c0_30 = arith.constant 0 : index
    %68 = vector.load %arg9[%c16_29, %c0_30] : memref<64x32xf32, #tpu.memory_space<vmem>>, vector<8x32xf32>
    tpu.vector_store %arg9[%c16_29, %c0_30], %67 {strides = array<i32>} : memref<64x32xf32, #tpu.memory_space<vmem>>, vector<8x32xf32>,
    %c24 = arith.constant 24 : index
    %c0_31 = arith.constant 0 : index
    %69 = vector.load %arg8[%c24, %c0_31] : memref<64x128xf32, #tpu.memory_space<vmem>>, vector<8x128xf32>
    %c0_32 = arith.constant 0 : index
    %c0_33 = arith.constant 0 : index
    %70 = vector.load %arg3[%c0_32, %c0_33] : memref<32x128xf32, #tpu.memory_space<vmem>>, vector<32x128xf32>
    %cst_34 = arith.constant dense<0.000000e+00> : vector<8x128xf32>
    %71 = tpu.matmul %67, %70, %cst_34 {dimension_numbers = #tpu.dot_dimension_numbers<[1], [0], [0], [1], [0, 0, 1, 1], [], []>} : vector<8x32xf32>, vector<32x128xf32>, vector<8x128xf32> -> vector<8x128xf32>
    %72 = arith.addf %69, %71 : vector<8x128xf32>
    %73 = arith.negf %72 : vector<8x128xf32>
    %74 = math.exp %73 : vector<8x128xf32>
    %cst_35 = arith.constant 1.000000e+00 : f32
    %75 = vector.broadcast %cst_35 : f32 to vector<8x128xf32>
    %76 = arith.addf %75, %74 : vector<8x128xf32>
    %77 = arith.divf %75, %76 : vector<8x128xf32>
    %78 = math.tanh %72 : vector<8x128xf32>
    %79 = vector.extract_strided_slice %77 {offsets = [0, 0], sizes = [8, 32], strides = [1, 1]} : vector<8x128xf32> to vector<8x32xf32>
    %80 = vector.extract_strided_slice %77 {offsets = [0, 32], sizes = [8, 32], strides = [1, 1]} : vector<8x128xf32> to vector<8x32xf32>
    %81 = vector.extract_strided_slice %78 {offsets = [0, 64], sizes = [8, 32], strides = [1, 1]} : vector<8x128xf32> to vector<8x32xf32>
    %82 = vector.extract_strided_slice %77 {offsets = [0, 96], sizes = [8, 32], strides = [1, 1]} : vector<8x128xf32> to vector<8x32xf32>
    %83 = arith.mulf %79, %65 : vector<8x32xf32>
    %84 = arith.mulf %80, %81 : vector<8x32xf32>
    %85 = arith.addf %83, %84 : vector<8x32xf32>
    %86 = math.tanh %85 : vector<8x32xf32>
    %87 = arith.mulf %82, %86 : vector<8x32xf32>
    %c24_36 = arith.constant 24 : index
    %c0_37 = arith.constant 0 : index
    %88 = vector.load %arg9[%c24_36, %c0_37] : memref<64x32xf32, #tpu.memory_space<vmem>>, vector<8x32xf32>
    tpu.vector_store %arg9[%c24_36, %c0_37], %87 {strides = array<i32>} : memref<64x32xf32, #tpu.memory_space<vmem>>, vector<8x32xf32>,
    %c32 = arith.constant 32 : index
    %c0_38 = arith.constant 0 : index
    %89 = vector.load %arg8[%c32, %c0_38] : memref<64x128xf32, #tpu.memory_space<vmem>>, vector<8x128xf32>
    %c0_39 = arith.constant 0 : index
    %c0_40 = arith.constant 0 : index
    %90 = vector.load %arg3[%c0_39, %c0_40] : memref<32x128xf32, #tpu.memory_space<vmem>>, vector<32x128xf32>
    %cst_41 = arith.constant dense<0.000000e+00> : vector<8x128xf32>
    %91 = tpu.matmul %87, %90, %cst_41 {dimension_numbers = #tpu.dot_dimension_numbers<[1], [0], [0], [1], [0, 0, 1, 1], [], []>} : vector<8x32xf32>, vector<32x128xf32>, vector<8x128xf32> -> vector<8x128xf32>
    %92 = arith.addf %89, %91 : vector<8x128xf32>
    %93 = arith.negf %92 : vector<8x128xf32>
    %94 = math.exp %93 : vector<8x128xf32>
    %cst_42 = arith.constant 1.000000e+00 : f32
    %95 = vector.broadcast %cst_42 : f32 to vector<8x128xf32>
    %96 = arith.addf %95, %94 : vector<8x128xf32>
    %97 = arith.divf %95, %96 : vector<8x128xf32>
    %98 = math.tanh %92 : vector<8x128xf32>
    %99 = vector.extract_strided_slice %97 {offsets = [0, 0], sizes = [8, 32], strides = [1, 1]} : vector<8x128xf32> to vector<8x32xf32>
    %100 = vector.extract_strided_slice %97 {offsets = [0, 32], sizes = [8, 32], strides = [1, 1]} : vector<8x128xf32> to vector<8x32xf32>
    %101 = vector.extract_strided_slice %98 {offsets = [0, 64], sizes = [8, 32], strides = [1, 1]} : vector<8x128xf32> to vector<8x32xf32>
    %102 = vector.extract_strided_slice %97 {offsets = [0, 96], sizes = [8, 32], strides = [1, 1]} : vector<8x128xf32> to vector<8x32xf32>
    %103 = arith.mulf %99, %85 : vector<8x32xf32>
    %104 = arith.mulf %100, %101 : vector<8x32xf32>
    %105 = arith.addf %103, %104 : vector<8x32xf32>
    %106 = math.tanh %105 : vector<8x32xf32>
    %107 = arith.mulf %102, %106 : vector<8x32xf32>
    %c32_43 = arith.constant 32 : index
    %c0_44 = arith.constant 0 : index
    %108 = vector.load %arg9[%c32_43, %c0_44] : memref<64x32xf32, #tpu.memory_space<vmem>>, vector<8x32xf32>
    tpu.vector_store %arg9[%c32_43, %c0_44], %107 {strides = array<i32>} : memref<64x32xf32, #tpu.memory_space<vmem>>, vector<8x32xf32>,
    %c40 = arith.constant 40 : index
    %c0_45 = arith.constant 0 : index
    %109 = vector.load %arg8[%c40, %c0_45] : memref<64x128xf32, #tpu.memory_space<vmem>>, vector<8x128xf32>
    %c0_46 = arith.constant 0 : index
    %c0_47 = arith.constant 0 : index
    %110 = vector.load %arg3[%c0_46, %c0_47] : memref<32x128xf32, #tpu.memory_space<vmem>>, vector<32x128xf32>
    %cst_48 = arith.constant dense<0.000000e+00> : vector<8x128xf32>
    %111 = tpu.matmul %107, %110, %cst_48 {dimension_numbers = #tpu.dot_dimension_numbers<[1], [0], [0], [1], [0, 0, 1, 1], [], []>} : vector<8x32xf32>, vector<32x128xf32>, vector<8x128xf32> -> vector<8x128xf32>
    %112 = arith.addf %109, %111 : vector<8x128xf32>
    %113 = arith.negf %112 : vector<8x128xf32>
    %114 = math.exp %113 : vector<8x128xf32>
    %cst_49 = arith.constant 1.000000e+00 : f32
    %115 = vector.broadcast %cst_49 : f32 to vector<8x128xf32>
    %116 = arith.addf %115, %114 : vector<8x128xf32>
    %117 = arith.divf %115, %116 : vector<8x128xf32>
    %118 = math.tanh %112 : vector<8x128xf32>
    %119 = vector.extract_strided_slice %117 {offsets = [0, 0], sizes = [8, 32], strides = [1, 1]} : vector<8x128xf32> to vector<8x32xf32>
    %120 = vector.extract_strided_slice %117 {offsets = [0, 32], sizes = [8, 32], strides = [1, 1]} : vector<8x128xf32> to vector<8x32xf32>
    %121 = vector.extract_strided_slice %118 {offsets = [0, 64], sizes = [8, 32], strides = [1, 1]} : vector<8x128xf32> to vector<8x32xf32>
    %122 = vector.extract_strided_slice %117 {offsets = [0, 96], sizes = [8, 32], strides = [1, 1]} : vector<8x128xf32> to vector<8x32xf32>
    %123 = arith.mulf %119, %105 : vector<8x32xf32>
    %124 = arith.mulf %120, %121 : vector<8x32xf32>
    %125 = arith.addf %123, %124 : vector<8x32xf32>
    %126 = math.tanh %125 : vector<8x32xf32>
    %127 = arith.mulf %122, %126 : vector<8x32xf32>
    %c40_50 = arith.constant 40 : index
    %c0_51 = arith.constant 0 : index
    %128 = vector.load %arg9[%c40_50, %c0_51] : memref<64x32xf32, #tpu.memory_space<vmem>>, vector<8x32xf32>
    tpu.vector_store %arg9[%c40_50, %c0_51], %127 {strides = array<i32>} : memref<64x32xf32, #tpu.memory_space<vmem>>, vector<8x32xf32>,
    %c48 = arith.constant 48 : index
    %c0_52 = arith.constant 0 : index
    %129 = vector.load %arg8[%c48, %c0_52] : memref<64x128xf32, #tpu.memory_space<vmem>>, vector<8x128xf32>
    %c0_53 = arith.constant 0 : index
    %c0_54 = arith.constant 0 : index
    %130 = vector.load %arg3[%c0_53, %c0_54] : memref<32x128xf32, #tpu.memory_space<vmem>>, vector<32x128xf32>
    %cst_55 = arith.constant dense<0.000000e+00> : vector<8x128xf32>
    %131 = tpu.matmul %127, %130, %cst_55 {dimension_numbers = #tpu.dot_dimension_numbers<[1], [0], [0], [1], [0, 0, 1, 1], [], []>} : vector<8x32xf32>, vector<32x128xf32>, vector<8x128xf32> -> vector<8x128xf32>
    %132 = arith.addf %129, %131 : vector<8x128xf32>
    %133 = arith.negf %132 : vector<8x128xf32>
    %134 = math.exp %133 : vector<8x128xf32>
    %cst_56 = arith.constant 1.000000e+00 : f32
    %135 = vector.broadcast %cst_56 : f32 to vector<8x128xf32>
    %136 = arith.addf %135, %134 : vector<8x128xf32>
    %137 = arith.divf %135, %136 : vector<8x128xf32>
    %138 = math.tanh %132 : vector<8x128xf32>
    %139 = vector.extract_strided_slice %137 {offsets = [0, 0], sizes = [8, 32], strides = [1, 1]} : vector<8x128xf32> to vector<8x32xf32>
    %140 = vector.extract_strided_slice %137 {offsets = [0, 32], sizes = [8, 32], strides = [1, 1]} : vector<8x128xf32> to vector<8x32xf32>
    %141 = vector.extract_strided_slice %138 {offsets = [0, 64], sizes = [8, 32], strides = [1, 1]} : vector<8x128xf32> to vector<8x32xf32>
    %142 = vector.extract_strided_slice %137 {offsets = [0, 96], sizes = [8, 32], strides = [1, 1]} : vector<8x128xf32> to vector<8x32xf32>
    %143 = arith.mulf %139, %125 : vector<8x32xf32>
    %144 = arith.mulf %140, %141 : vector<8x32xf32>
    %145 = arith.addf %143, %144 : vector<8x32xf32>
    %146 = math.tanh %145 : vector<8x32xf32>
    %147 = arith.mulf %142, %146 : vector<8x32xf32>
    %c48_57 = arith.constant 48 : index
    %c0_58 = arith.constant 0 : index
    %148 = vector.load %arg9[%c48_57, %c0_58] : memref<64x32xf32, #tpu.memory_space<vmem>>, vector<8x32xf32>
    tpu.vector_store %arg9[%c48_57, %c0_58], %147 {strides = array<i32>} : memref<64x32xf32, #tpu.memory_space<vmem>>, vector<8x32xf32>,
    %c56 = arith.constant 56 : index
    %c0_59 = arith.constant 0 : index
    %149 = vector.load %arg8[%c56, %c0_59] : memref<64x128xf32, #tpu.memory_space<vmem>>, vector<8x128xf32>
    %c0_60 = arith.constant 0 : index
    %c0_61 = arith.constant 0 : index
    %150 = vector.load %arg3[%c0_60, %c0_61] : memref<32x128xf32, #tpu.memory_space<vmem>>, vector<32x128xf32>
    %cst_62 = arith.constant dense<0.000000e+00> : vector<8x128xf32>
    %151 = tpu.matmul %147, %150, %cst_62 {dimension_numbers = #tpu.dot_dimension_numbers<[1], [0], [0], [1], [0, 0, 1, 1], [], []>} : vector<8x32xf32>, vector<32x128xf32>, vector<8x128xf32> -> vector<8x128xf32>
    %152 = arith.addf %149, %151 : vector<8x128xf32>
    %153 = arith.negf %152 : vector<8x128xf32>
    %154 = math.exp %153 : vector<8x128xf32>
    %cst_63 = arith.constant 1.000000e+00 : f32
    %155 = vector.broadcast %cst_63 : f32 to vector<8x128xf32>
    %156 = arith.addf %155, %154 : vector<8x128xf32>
    %157 = arith.divf %155, %156 : vector<8x128xf32>
    %158 = math.tanh %152 : vector<8x128xf32>
    %159 = vector.extract_strided_slice %157 {offsets = [0, 0], sizes = [8, 32], strides = [1, 1]} : vector<8x128xf32> to vector<8x32xf32>
    %160 = vector.extract_strided_slice %157 {offsets = [0, 32], sizes = [8, 32], strides = [1, 1]} : vector<8x128xf32> to vector<8x32xf32>
    %161 = vector.extract_strided_slice %158 {offsets = [0, 64], sizes = [8, 32], strides = [1, 1]} : vector<8x128xf32> to vector<8x32xf32>
    %162 = vector.extract_strided_slice %157 {offsets = [0, 96], sizes = [8, 32], strides = [1, 1]} : vector<8x128xf32> to vector<8x32xf32>
    %163 = arith.mulf %159, %145 : vector<8x32xf32>
    %164 = arith.mulf %160, %161 : vector<8x32xf32>
    %165 = arith.addf %163, %164 : vector<8x32xf32>
    %166 = math.tanh %165 : vector<8x32xf32>
    %167 = arith.mulf %162, %166 : vector<8x32xf32>
    %c56_64 = arith.constant 56 : index
    %c0_65 = arith.constant 0 : index
    %168 = vector.load %arg9[%c56_64, %c0_65] : memref<64x32xf32, #tpu.memory_space<vmem>>, vector<8x32xf32>
    tpu.vector_store %arg9[%c56_64, %c0_65], %167 {strides = array<i32>} : memref<64x32xf32, #tpu.memory_space<vmem>>, vector<8x32xf32>,
    %c0_66 = arith.constant 0 : index
    %c0_67 = arith.constant 0 : index
    %169 = vector.load %arg9[%c0_66, %c0_67] : memref<64x32xf32, #tpu.memory_space<vmem>>, vector<64x32xf32>
    %c0_68 = arith.constant 0 : index
    %c0_69 = arith.constant 0 : index
    %170 = vector.load %arg5[%c0_68, %c0_69] : memref<32x16xf32, #tpu.memory_space<vmem>>, vector<32x16xf32>
    %cst_70 = arith.constant dense<0.000000e+00> : vector<64x16xf32>
    %171 = tpu.matmul %169, %170, %cst_70 {dimension_numbers = #tpu.dot_dimension_numbers<[1], [0], [0], [1], [0, 0, 1, 1], [], []>} : vector<64x32xf32>, vector<32x16xf32>, vector<64x16xf32> -> vector<64x16xf32>
    %c0_71 = arith.constant 0 : index
    %c0_72 = arith.constant 0 : index
    %172 = vector.load %arg6[%c0_71, %c0_72] : memref<1x16xf32, #tpu.memory_space<vmem>>, vector<1x16xf32>
    %173 = vector.broadcast %172 : vector<1x16xf32> to vector<64x16xf32>
    %174 = arith.addf %171, %173 : vector<64x16xf32>
    %c0_73 = arith.constant 0 : index
    %c0_74 = arith.constant 0 : index
    %175 = vector.load %arg7[%c0_73, %c0_74] : memref<64x16xf32, #tpu.memory_space<vmem>>, vector<64x16xf32>
    tpu.vector_store %arg7[%c0_73, %c0_74], %174 {strides = array<i32>} : memref<64x16xf32, #tpu.memory_space<vmem>>, vector<64x16xf32>,
    return
  }
  func.func @transform_0(%arg0: i32) -> (i32, i32) {
    %c0_i32 = arith.constant 0 : i32
    %c0_i32_0 = arith.constant 0 : i32
    %c0_i32_1 = arith.constant 0 : i32
    return %c0_i32, %c0_i32_0 : i32, i32
  }
  func.func @transform_1(%arg0: i32) -> (i32, i32) {
    %c0_i32 = arith.constant 0 : i32
    %c0_i32_0 = arith.constant 0 : i32
    %c0_i32_1 = arith.constant 0 : i32
    return %c0_i32, %c0_i32_0 : i32, i32
  }
  func.func @transform_2(%arg0: i32) -> (i32, i32) {
    %c0_i32 = arith.constant 0 : i32
    %c0_i32_0 = arith.constant 0 : i32
    %c0_i32_1 = arith.constant 0 : i32
    return %c0_i32, %c0_i32_0 : i32, i32
  }
  func.func @transform_3(%arg0: i32) -> (i32, i32) {
    %c0_i32 = arith.constant 0 : i32
    %c0_i32_0 = arith.constant 0 : i32
    %c0_i32_1 = arith.constant 0 : i32
    return %c0_i32, %c0_i32_0 : i32, i32
  }
  func.func @transform_4(%arg0: i32) -> (i32, i32) {
    %c0_i32 = arith.constant 0 : i32
    %c0_i32_0 = arith.constant 0 : i32
    %c0_i32_1 = arith.constant 0 : i32
    return %c0_i32, %c0_i32_0 : i32, i32
  }
  func.func @transform_5(%arg0: i32) -> (i32, i32) {
    %c0_i32 = arith.constant 0 : i32
    %c0_i32_0 = arith.constant 0 : i32
    %c0_i32_1 = arith.constant 0 : i32
    return %c0_i32, %c0_i32_0 : i32, i32
  }
  func.func @transform_6(%arg0: i32) -> (i32, i32) {
    %c0_i32 = arith.constant 0 : i32
    %c0_i32_0 = arith.constant 0 : i32
    %c0_i32_1 = arith.constant 0 : i32
    return %c0_i32, %c0_i32_0 : i32, i32
  }
}

</mosaic_0001>

<llo_original>
// kernel: tpu_custom_call.1
$region0: #{tpu_custom_call.1}
  #allocation0 [shape = 'u32[]', space=smem, size = 0x4, offset = 0x4, fixed_abs, tag = 'smem constant byte address 0x4 - core index']
  #allocation1 [shape = 'u32[72,128]{1,0:T(1,128)}', space=vmem, size = 0x9000, scoped, tag = 'internal scratch']
  #allocation2 [shape = 'f32[64,128]{1,0:T(8,128)}', space=vmem, size = 0x8000, scoped, tag = 'scratch operand']
  #allocation3 [shape = 'f32[64,32]{1,0:T(8,128)}', space=vmem, size = 0x8000, scoped, tag = 'scratch operand']
  %s0 = inlined_call_operand.vmem [shape: f32[64,32], index: 0, kind: input, shape index: {}]
  %s1 = inlined_call_operand.vmem [shape: f32[32,128], index: 1, kind: input, shape index: {}]
  %s2 = inlined_call_operand.vmem [shape: f32[32,128], index: 2, kind: input, shape index: {}]
  %s3 = inlined_call_operand.vmem [shape: f32[1,128], index: 3, kind: input, shape index: {}]
  %s4 = inlined_call_operand.vmem [shape: f32[32,16], index: 4, kind: input, shape index: {}]
  %s5 = inlined_call_operand.vmem [shape: f32[1,16], index: 5, kind: input, shape index: {}]
  %s6 = inlined_call_operand.vmem [shape: f32[64,16], index: 6, kind: output, shape index: {}]
  %s7 = sld [smem:[#allocation0]]
  $region34: #{tpu_custom_call.1} parent=0
    _
  %s9 = ssub.s32 1, %s7
  %s10 = scalar_select 0, %s9, %s7
  // Predicated region
  $region2: #{tpu_custom_call.1} parent=0 // pred_check
    _
  $region3: #{tpu_custom_call.1} parent=0 // pred_check_branch
    %12 = sbr.rel (0) target = $region5
  $region4: #{tpu_custom_call.1} parent=0 // pred_region
    _
  $region5: #{tpu_custom_call.1} parent=0 // pred_fallthru
    _
  // Predicated region
  $region6: #{tpu_custom_call.1} parent=0 // pred_check
    _
  $region7: #{tpu_custom_call.1} parent=0 // pred_check_branch
    %14 = sbr.rel (0) target = $region9
  $region8: #{tpu_custom_call.1} parent=0 // pred_region
    _
  $region9: #{tpu_custom_call.1} parent=0 // pred_fallthru
    _
  // Predicated region
  $region10: #{tpu_custom_call.1} parent=0 // pred_check
    _
  $region11: #{tpu_custom_call.1} parent=0 // pred_check_branch
    %16 = sbr.rel (0) target = $region13
  $region12: #{tpu_custom_call.1} parent=0 // pred_region
    _
  $region13: #{tpu_custom_call.1} parent=0 // pred_fallthru
    _
  // Predicated region
  $region14: #{tpu_custom_call.1} parent=0 // pred_check
    _
  $region15: #{tpu_custom_call.1} parent=0 // pred_check_branch
    %18 = sbr.rel (0) target = $region17
  $region16: #{tpu_custom_call.1} parent=0 // pred_region
    _
  $region17: #{tpu_custom_call.1} parent=0 // pred_fallthru
    _
  // Predicated region
  $region18: #{tpu_custom_call.1} parent=0 // pred_check
    _
  $region19: #{tpu_custom_call.1} parent=0 // pred_check_branch
    %20 = sbr.rel (0) target = $region21
  $region20: #{tpu_custom_call.1} parent=0 // pred_region
    _
  $region21: #{tpu_custom_call.1} parent=0 // pred_fallthru
    _
  // Predicated region
  $region22: #{tpu_custom_call.1} parent=0 // pred_check
    _
  $region23: #{tpu_custom_call.1} parent=0 // pred_check_branch
    %22 = sbr.rel (0) target = $region25
  $region24: #{tpu_custom_call.1} parent=0 // pred_region
    _
  $region25: #{tpu_custom_call.1} parent=0 // pred_fallthru
    _
  %v23 = vld [vmem:[%s0] sm:$0xff]
  %v24 = vld [vmem:[%s0 + $0x8] sm:$0xff]
  %v25 = vld [vmem:[%s0 + $0x10] sm:$0xff]
  %v26 = vld [vmem:[%s0 + $0x18] sm:$0xff]
  %v27 = vld [vmem:[%s0 + $0x20] sm:$0xff]
  %v28 = vld [vmem:[%s0 + $0x28] sm:$0xff]
  %v29 = vld [vmem:[%s0 + $0x30] sm:$0xff]
  %v30 = vld [vmem:[%s0 + $0x38] sm:$0xff]
  %v31 = vld [vmem:[%s1] sm:$0xff]
  %v32 = vld [vmem:[%s1 + $0x8] sm:$0xff]
  %v33 = vld [vmem:[%s1 + $0x10] sm:$0xff]
  %v34 = vld [vmem:[%s1 + $0x18] sm:$0xff]
  %v35 = vld [vmem:[%s3] sm:$0x1]
  %v37 = vperm.slane %v35, 0
  %vm39 = vcmask 261120
  %v41 = vsel %vm39, %v23, 0
  %v44 = vsel %vm39, %v24, 0
  %v47 = vsel %vm39, %v25, 0
  %v50 = vsel %vm39, %v26, 0
  %v53 = vsel %vm39, %v27, 0
  %v56 = vsel %vm39, %v28, 0
  %v59 = vsel %vm39, %v29, 0
  %v62 = vsel %vm39, %v30, 0
  %64 = vmatpush.msra.mxu0 0.0
  %65 = vmatpush.msra.mxu0 0.0
  %66 = vmatpush.msra.mxu0 0.0
  %67 = vmatpush.msra.mxu0 0.0
  %68 = vmatpush.msra.mxu0 0.0
  %69 = vmatpush.msra.mxu0 0.0
  %70 = vmatpush.msra.mxu0 0.0
  %71 = vmatpush.msra.mxu0 0.0
  %72 = vmatpush.msra.mxu0 0.0
  %73 = vmatpush.msra.mxu0 0.0
  %74 = vmatpush.msra.mxu0 0.0
  %75 = vmatpush.msra.mxu0 0.0
  %76 = vmatpush.msra.mxu0 %v34
  %77 = vmatpush.msra.mxu0 %v33
  %78 = vmatpush.msra.mxu0 %v32
  %79 = vmatpush.msra.mxu0 %v31
  %80 = vmatmul.f32.gmra.mxu0 %v41
  %v81 = vpop.f32.mrf.mxu0
  %v82 = vadd.f32 %v37, %v81
  %83 = vmatmul.f32.gmra.mxu0 %v44
  %v84 = vpop.f32.mrf.mxu0
  %v85 = vadd.f32 %v37, %v84
  %86 = vmatmul.f32.gmra.mxu0 %v47
  %v87 = vpop.f32.mrf.mxu0
  %v88 = vadd.f32 %v37, %v87
  %89 = vmatmul.f32.gmra.mxu0 %v50
  %v90 = vpop.f32.mrf.mxu0
  %v91 = vadd.f32 %v37, %v90
  %92 = vmatmul.f32.gmra.mxu0 %v53
  %v93 = vpop.f32.mrf.mxu0
  %v94 = vadd.f32 %v37, %v93
  %95 = vmatmul.f32.gmra.mxu0 %v56
  %v96 = vpop.f32.mrf.mxu0
  %v97 = vadd.f32 %v37, %v96
  %98 = vmatmul.f32.gmra.mxu0 %v59
  %v99 = vpop.f32.mrf.mxu0
  %v100 = vadd.f32 %v37, %v99
  %101 = vmatmul.f32.gmra.mxu0 %v62
  %v102 = vpop.f32.mrf.mxu0
  %v103 = vadd.f32 %v37, %v102
  %104 = vdwg.mxu0
  %105 = vst [vmem:[#allocation2] sm:$0xff] %v82
  %106 = vst [vmem:[#allocation2 + $0x8] sm:$0xff] %v85
  %107 = vst [vmem:[#allocation2 + $0x10] sm:$0xff] %v88
  %108 = vst [vmem:[#allocation2 + $0x18] sm:$0xff] %v91
  %109 = vst [vmem:[#allocation2 + $0x20] sm:$0xff] %v94
  %110 = vst [vmem:[#allocation2 + $0x28] sm:$0xff] %v97
  %111 = vst [vmem:[#allocation2 + $0x30] sm:$0xff] %v100
  %112 = vst [vmem:[#allocation2 + $0x38] sm:$0xff] %v103
  %v113 = vld [vmem:[#allocation2] sm:$0xff]
  %v114 = vld [vmem:[%s2] sm:$0xff]
  %v115 = vld [vmem:[%s2 + $0x8] sm:$0xff]
  %v116 = vld [vmem:[%s2 + $0x10] sm:$0xff]
  %v117 = vld [vmem:[%s2 + $0x18] sm:$0xff]
  %v119 = vsel %vm39, 0.0, 0
  %121 = vmatpush.msra.mxu0 0.0
  %122 = vmatpush.msra.mxu0 0.0
  %123 = vmatpush.msra.mxu0 0.0
  %124 = vmatpush.msra.mxu0 0.0
  %125 = vmatpush.msra.mxu0 0.0
  %126 = vmatpush.msra.mxu0 0.0
  %127 = vmatpush.msra.mxu0 0.0
  %128 = vmatpush.msra.mxu0 0.0
  %129 = vmatpush.msra.mxu0 0.0
  %130 = vmatpush.msra.mxu0 0.0
  %131 = vmatpush.msra.mxu0 0.0
  %132 = vmatpush.msra.mxu0 0.0
  %133 = vmatpush.msra.mxu0 %v117
  %134 = vmatpush.msra.mxu0 %v116
  %135 = vmatpush.msra.mxu0 %v115
  %136 = vmatpush.msra.mxu0 %v114
  %137 = vmatmul.f32.gmra.mxu0 %v119
  %v138 = vpop.f32.mrf.mxu0
  %v139 = vadd.f32 0.0, %v138
  %140 = vdwg.mxu0
  %v141 = vadd.f32 %v113, %v139
  %v142 = vxor.u32 %v141, 2147483648
  %v143 = vmul.f32 %v142, 1.442695
  %v144 = vpow.pop %v143
  %v145 = vadd.f32 %v144, 1.0
  %v146 = vrcp.pop %v145
  %v147 = vmul.f32 %v145, %v146
  %v148 = vsub.f32 1.0, %v147
  %v149 = vmul.f32 %v146, %v148
  %v150 = vadd.f32 %v146, %v149
  %vm151 = vweird.f32 %v145
  %vm152 = vweird.f32 %v146
  %vm153 = vmor %vm151, %vm152
  %v154 = vsel %vm153, %v146, %v150
  %v155 = vand.u32 2147483647, %v145
  %vm156 = vcmp.eq.f32.partialorder %v155, 8.507059e+37
  %v157 = vand.u32 %v145, 2147483648
  %v158 = vor.u32 1.1754944e-38, %v157
  %v159 = vsel %vm156, %v158, %v154
  %v160 = vmul.f32 1.0, %v159
  %v161 = vtanh.pop %v141
  %v162 = vmul.f32 %v160, 0.0
  %164 = vrot.lane.b32.xlu0 %v161, 96
  %v165 = vpop.permute.xlu0 %164
  %v167 = vmul.f32 %v160, %v165
  %169 = vrot.lane.b32.xlu0 %v167, 96
  %v170 = vpop.permute.xlu0 %169
  %v172 = vadd.f32 %v162, %v170
  %v173 = vtanh.pop %v172
  %175 = vrot.lane.b32.xlu0 %v173, 96
  %v176 = vpop.permute.xlu0 %175
  %v178 = vmul.f32 %v160, %v176
  %180 = vrot.lane.b32.xlu0 %v178, 32
  %v181 = vpop.permute.xlu0 %180
  %183 = vst.msk [vmem:[#allocation3] sm:$0xff] %vm39, %v181
  %v184 = vld [vmem:[#allocation2 + $0x8] sm:$0xff]
  %v185 = vld [vmem:[%s2] sm:$0xff]
  %v186 = vld [vmem:[%s2 + $0x8] sm:$0xff]
  %v187 = vld [vmem:[%s2 + $0x10] sm:$0xff]
  %v188 = vld [vmem:[%s2 + $0x18] sm:$0xff]
  %v189 = vsel %vm39, %v181, 0
  %191 = vmatpush.msra.mxu0 0.0
  %192 = vmatpush.msra.mxu0 0.0
  %193 = vmatpush.msra.mxu0 0.0
  %194 = vmatpush.msra.mxu0 0.0
  %195 = vmatpush.msra.mxu0 0.0
  %196 = vmatpush.msra.mxu0 0.0
  %197 = vmatpush.msra.mxu0 0.0
  %198 = vmatpush.msra.mxu0 0.0
  %199 = vmatpush.msra.mxu0 0.0
  %200 = vmatpush.msra.mxu0 0.0
  %201 = vmatpush.msra.mxu0 0.0
  %202 = vmatpush.msra.mxu0 0.0
  %203 = vmatpush.msra.mxu0 %v188
  %204 = vmatpush.msra.mxu0 %v187
  %205 = vmatpush.msra.mxu0 %v186
  %206 = vmatpush.msra.mxu0 %v185
  %207 = vmatmul.f32.gmra.mxu0 %v189
  %v208 = vpop.f32.mrf.mxu0
  %v209 = vadd.f32 0.0, %v208
  %210 = vdwg.mxu0
  %v211 = vadd.f32 %v184, %v209
  %v212 = vxor.u32 %v211, 2147483648
  %v213 = vmul.f32 %v212, 1.442695
  %v214 = vpow.pop %v213
  %v215 = vadd.f32 %v214, 1.0
  %v216 = vrcp.pop %v215
  %v217 = vmul.f32 %v215, %v216
  %v218 = vsub.f32 1.0, %v217
  %v219 = vmul.f32 %v216, %v218
  %v220 = vadd.f32 %v216, %v219
  %vm221 = vweird.f32 %v215
  %vm222 = vweird.f32 %v216
  %vm223 = vmor %vm221, %vm222
  %v224 = vsel %vm223, %v216, %v220
  %v225 = vand.u32 2147483647, %v215
  %vm226 = vcmp.eq.f32.partialorder %v225, 8.507059e+37
  %v227 = vand.u32 %v215, 2147483648
  %v228 = vor.u32 1.1754944e-38, %v227
  %v229 = vsel %vm226, %v228, %v224
  %v230 = vmul.f32 1.0, %v229
  %v231 = vtanh.pop %v211
  %v232 = vmul.f32 %v230, %v172
  %234 = vrot.lane.b32.xlu0 %v231, 96
  %v235 = vpop.permute.xlu0 %234
  %v237 = vmul.f32 %v230, %v235
  %239 = vrot.lane.b32.xlu0 %v237, 96
  %v240 = vpop.permute.xlu0 %239
  %v242 = vadd.f32 %v232, %v240
  %v243 = vtanh.pop %v242
  %245 = vrot.lane.b32.xlu0 %v243, 96
  %v246 = vpop.permute.xlu0 %245
  %v248 = vmul.f32 %v230, %v246
  %250 = vrot.lane.b32.xlu0 %v248, 32
  %v251 = vpop.permute.xlu0 %250
  %253 = vst.msk [vmem:[#allocation3 + $0x8] sm:$0xff] %vm39, %v251
  %v254 = vld [vmem:[#allocation2 + $0x10] sm:$0xff]
  %v255 = vld [vmem:[%s2] sm:$0xff]
  %v256 = vld [vmem:[%s2 + $0x8] sm:$0xff]
  %v257 = vld [vmem:[%s2 + $0x10] sm:$0xff]
  %v258 = vld [vmem:[%s2 + $0x18] sm:$0xff]
  %v259 = vsel %vm39, %v251, 0
  %261 = vmatpush.msra.mxu0 0.0
  %262 = vmatpush.msra.mxu0 0.0
  %263 = vmatpush.msra.mxu0 0.0
  %264 = vmatpush.msra.mxu0 0.0
  %265 = vmatpush.msra.mxu0 0.0
  %266 = vmatpush.msra.mxu0 0.0
  %267 = vmatpush.msra.mxu0 0.0
  %268 = vmatpush.msra.mxu0 0.0
  %269 = vmatpush.msra.mxu0 0.0
  %270 = vmatpush.msra.mxu0 0.0
  %271 = vmatpush.msra.mxu0 0.0
  %272 = vmatpush.msra.mxu0 0.0
  %273 = vmatpush.msra.mxu0 %v258
  %274 = vmatpush.msra.mxu0 %v257
  %275 = vmatpush.msra.mxu0 %v256
  %276 = vmatpush.msra.mxu0 %v255
  %277 = vmatmul.f32.gmra.mxu0 %v259
  %v278 = vpop.f32.mrf.mxu0
  %v279 = vadd.f32 0.0, %v278
  %280 = vdwg.mxu0
  %v281 = vadd.f32 %v254, %v279
  %v282 = vxor.u32 %v281, 2147483648
  %v283 = vmul.f32 %v282, 1.442695
  %v284 = vpow.pop %v283
  %v285 = vadd.f32 %v284, 1.0
  %v286 = vrcp.pop %v285
  %v287 = vmul.f32 %v285, %v286
  %v288 = vsub.f32 1.0, %v287
  %v289 = vmul.f32 %v286, %v288
  %v290 = vadd.f32 %v286, %v289
  %vm291 = vweird.f32 %v285
  %vm292 = vweird.f32 %v286
  %vm293 = vmor %vm291, %vm292
  %v294 = vsel %vm293, %v286, %v290
  %v295 = vand.u32 2147483647, %v285
  %vm296 = vcmp.eq.f32.partialorder %v295, 8.507059e+37
  %v297 = vand.u32 %v285, 2147483648
  %v298 = vor.u32 1.1754944e-38, %v297
  %v299 = vsel %vm296, %v298, %v294
  %v300 = vmul.f32 1.0, %v299
  %v301 = vtanh.pop %v281
  %v302 = vmul.f32 %v300, %v242
  %304 = vrot.lane.b32.xlu0 %v301, 96
  %v305 = vpop.permute.xlu0 %304
  %v307 = vmul.f32 %v300, %v305
  %309 = vrot.lane.b32.xlu0 %v307, 96
  %v310 = vpop.permute.xlu0 %309
  %v312 = vadd.f32 %v302, %v310
  %v313 = vtanh.pop %v312
  %315 = vrot.lane.b32.xlu0 %v313, 96
  %v316 = vpop.permute.xlu0 %315
  %v318 = vmul.f32 %v300, %v316
  %320 = vrot.lane.b32.xlu0 %v318, 32
  %v321 = vpop.permute.xlu0 %320
  %323 = vst.msk [vmem:[#allocation3 + $0x10] sm:$0xff] %vm39, %v321
  %v324 = vld [vmem:[#allocation2 + $0x18] sm:$0xff]
  %v325 = vld [vmem:[%s2] sm:$0xff]
  %v326 = vld [vmem:[%s2 + $0x8] sm:$0xff]
  %v327 = vld [vmem:[%s2 + $0x10] sm:$0xff]
  %v328 = vld [vmem:[%s2 + $0x18] sm:$0xff]
  %v329 = vsel %vm39, %v321, 0
  %331 = vmatpush.msra.mxu0 0.0
  %332 = vmatpush.msra.mxu0 0.0
  %333 = vmatpush.msra.mxu0 0.0
  %334 = vmatpush.msra.mxu0 0.0
  %335 = vmatpush.msra.mxu0 0.0
  %336 = vmatpush.msra.mxu0 0.0
  %337 = vmatpush.msra.mxu0 0.0
  %338 = vmatpush.msra.mxu0 0.0
  %339 = vmatpush.msra.mxu0 0.0
  %340 = vmatpush.msra.mxu0 0.0
  %341 = vmatpush.msra.mxu0 0.0
  %342 = vmatpush.msra.mxu0 0.0
  %343 = vmatpush.msra.mxu0 %v328
  %344 = vmatpush.msra.mxu0 %v327
  %345 = vmatpush.msra.mxu0 %v326
  %346 = vmatpush.msra.mxu0 %v325
  %347 = vmatmul.f32.gmra.mxu0 %v329
  %v348 = vpop.f32.mrf.mxu0
  %v349 = vadd.f32 0.0, %v348
  %350 = vdwg.mxu0
  %v351 = vadd.f32 %v324, %v349
  %v352 = vxor.u32 %v351, 2147483648
  %v353 = vmul.f32 %v352, 1.442695
  %v354 = vpow.pop %v353
  %v355 = vadd.f32 %v354, 1.0
  %v356 = vrcp.pop %v355
  %v357 = vmul.f32 %v355, %v356
  %v358 = vsub.f32 1.0, %v357
  %v359 = vmul.f32 %v356, %v358
  %v360 = vadd.f32 %v356, %v359
  %vm361 = vweird.f32 %v355
  %vm362 = vweird.f32 %v356
  %vm363 = vmor %vm361, %vm362
  %v364 = vsel %vm363, %v356, %v360
  %v365 = vand.u32 2147483647, %v355
  %vm366 = vcmp.eq.f32.partialorder %v365, 8.507059e+37
  %v367 = vand.u32 %v355, 2147483648
  %v368 = vor.u32 1.1754944e-38, %v367
  %v369 = vsel %vm366, %v368, %v364
  %v370 = vmul.f32 1.0, %v369
  %v371 = vtanh.pop %v351
  %v372 = vmul.f32 %v370, %v312
  %374 = vrot.lane.b32.xlu0 %v371, 96
  %v375 = vpop.permute.xlu0 %374
  %v377 = vmul.f32 %v370, %v375
  %379 = vrot.lane.b32.xlu0 %v377, 96
  %v380 = vpop.permute.xlu0 %379
  %v382 = vadd.f32 %v372, %v380
  %v383 = vtanh.pop %v382
  %385 = vrot.lane.b32.xlu0 %v383, 96
  %v386 = vpop.permute.xlu0 %385
  %v388 = vmul.f32 %v370, %v386
  %390 = vrot.lane.b32.xlu0 %v388, 32
  %v391 = vpop.permute.xlu0 %390
  %393 = vst.msk [vmem:[#allocation3 + $0x18] sm:$0xff] %vm39, %v391
  %v394 = vld [vmem:[#allocation2 + $0x20] sm:$0xff]
  %v395 = vld [vmem:[%s2] sm:$0xff]
  %v396 = vld [vmem:[%s2 + $0x8] sm:$0xff]
  %v397 = vld [vmem:[%s2 + $0x10] sm:$0xff]
  %v398 = vld [vmem:[%s2 + $0x18] sm:$0xff]
  %v399 = vsel %vm39, %v391, 0
  %401 = vmatpush.msra.mxu0 0.0
  %402 = vmatpush.msra.mxu0 0.0
  %403 = vmatpush.msra.mxu0 0.0
  %404 = vmatpush.msra.mxu0 0.0
  %405 = vmatpush.msra.mxu0 0.0
  %406 = vmatpush.msra.mxu0 0.0
  %407 = vmatpush.msra.mxu0 0.0
  %408 = vmatpush.msra.mxu0 0.0
  %409 = vmatpush.msra.mxu0 0.0
  %410 = vmatpush.msra.mxu0 0.0
  %411 = vmatpush.msra.mxu0 0.0
  %412 = vmatpush.msra.mxu0 0.0
  %413 = vmatpush.msra.mxu0 %v398
  %414 = vmatpush.msra.mxu0 %v397
  %415 = vmatpush.msra.mxu0 %v396
  %416 = vmatpush.msra.mxu0 %v395
  %417 = vmatmul.f32.gmra.mxu0 %v399
  %v418 = vpop.f32.mrf.mxu0
  %v419 = vadd.f32 0.0, %v418
  %420 = vdwg.mxu0
  %v421 = vadd.f32 %v394, %v419
  %v422 = vxor.u32 %v421, 2147483648
  %v423 = vmul.f32 %v422, 1.442695
  %v424 = vpow.pop %v423
  %v425 = vadd.f32 %v424, 1.0
  %v426 = vrcp.pop %v425
  %v427 = vmul.f32 %v425, %v426
  %v428 = vsub.f32 1.0, %v427
  %v429 = vmul.f32 %v426, %v428
  %v430 = vadd.f32 %v426, %v429
  %vm431 = vweird.f32 %v425
  %vm432 = vweird.f32 %v426
  %vm433 = vmor %vm431, %vm432
  %v434 = vsel %vm433, %v426, %v430
  %v435 = vand.u32 2147483647, %v425
  %vm436 = vcmp.eq.f32.partialorder %v435, 8.507059e+37
  %v437 = vand.u32 %v425, 2147483648
  %v438 = vor.u32 1.1754944e-38, %v437
  %v439 = vsel %vm436, %v438, %v434
  %v440 = vmul.f32 1.0, %v439
  %v441 = vtanh.pop %v421
  %v442 = vmul.f32 %v440, %v382
  %444 = vrot.lane.b32.xlu0 %v441, 96
  %v445 = vpop.permute.xlu0 %444
  %v447 = vmul.f32 %v440, %v445
  %449 = vrot.lane.b32.xlu0 %v447, 96
  %v450 = vpop.permute.xlu0 %449
  %v452 = vadd.f32 %v442, %v450
  %v453 = vtanh.pop %v452
  %455 = vrot.lane.b32.xlu0 %v453, 96
  %v456 = vpop.permute.xlu0 %455
  %v458 = vmul.f32 %v440, %v456
  %460 = vrot.lane.b32.xlu0 %v458, 32
  %v461 = vpop.permute.xlu0 %460
  %463 = vst.msk [vmem:[#allocation3 + $0x20] sm:$0xff] %vm39, %v461
  %v464 = vld [vmem:[#allocation2 + $0x28] sm:$0xff]
  %v465 = vld [vmem:[%s2] sm:$0xff]
  %v466 = vld [vmem:[%s2 + $0x8] sm:$0xff]
  %v467 = vld [vmem:[%s2 + $0x10] sm:$0xff]
  %v468 = vld [vmem:[%s2 + $0x18] sm:$0xff]
  %v469 = vsel %vm39, %v461, 0
  %471 = vmatpush.msra.mxu0 0.0
  %472 = vmatpush.msra.mxu0 0.0
  %473 = vmatpush.msra.mxu0 0.0
  %474 = vmatpush.msra.mxu0 0.0
  %475 = vmatpush.msra.mxu0 0.0
  %476 = vmatpush.msra.mxu0 0.0
  %477 = vmatpush.msra.mxu0 0.0
  %478 = vmatpush.msra.mxu0 0.0
  %479 = vmatpush.msra.mxu0 0.0
  %480 = vmatpush.msra.mxu0 0.0
  %481 = vmatpush.msra.mxu0 0.0
  %482 = vmatpush.msra.mxu0 0.0
  %483 = vmatpush.msra.mxu0 %v468
  %484 = vmatpush.msra.mxu0 %v467
  %485 = vmatpush.msra.mxu0 %v466
  %486 = vmatpush.msra.mxu0 %v465
  %487 = vmatmul.f32.gmra.mxu0 %v469
  %v488 = vpop.f32.mrf.mxu0
  %v489 = vadd.f32 0.0, %v488
  %490 = vdwg.mxu0
  %v491 = vadd.f32 %v464, %v489
  %v492 = vxor.u32 %v491, 2147483648
  %v493 = vmul.f32 %v492, 1.442695
  %v494 = vpow.pop %v493
  %v495 = vadd.f32 %v494, 1.0
  %v496 = vrcp.pop %v495
  %v497 = vmul.f32 %v495, %v496
  %v498 = vsub.f32 1.0, %v497
  %v499 = vmul.f32 %v496, %v498
  %v500 = vadd.f32 %v496, %v499
  %vm501 = vweird.f32 %v495
  %vm502 = vweird.f32 %v496
  %vm503 = vmor %vm501, %vm502
  %v504 = vsel %vm503, %v496, %v500
  %v505 = vand.u32 2147483647, %v495
  %vm506 = vcmp.eq.f32.partialorder %v505, 8.507059e+37
  %v507 = vand.u32 %v495, 2147483648
  %v508 = vor.u32 1.1754944e-38, %v507
  %v509 = vsel %vm506, %v508, %v504
  %v510 = vmul.f32 1.0, %v509
  %v511 = vtanh.pop %v491
  %v512 = vmul.f32 %v510, %v452
  %514 = vrot.lane.b32.xlu0 %v511, 96
  %v515 = vpop.permute.xlu0 %514
  %v517 = vmul.f32 %v510, %v515
  %519 = vrot.lane.b32.xlu0 %v517, 96
  %v520 = vpop.permute.xlu0 %519
  %v522 = vadd.f32 %v512, %v520
  %v523 = vtanh.pop %v522
  %525 = vrot.lane.b32.xlu0 %v523, 96
  %v526 = vpop.permute.xlu0 %525
  %v528 = vmul.f32 %v510, %v526
  %530 = vrot.lane.b32.xlu0 %v528, 32
  %v531 = vpop.permute.xlu0 %530
  %533 = vst.msk [vmem:[#allocation3 + $0x28] sm:$0xff] %vm39, %v531
  %v534 = vld [vmem:[#allocation2 + $0x30] sm:$0xff]
  %v535 = vld [vmem:[%s2] sm:$0xff]
  %v536 = vld [vmem:[%s2 + $0x8] sm:$0xff]
  %v537 = vld [vmem:[%s2 + $0x10] sm:$0xff]
  %v538 = vld [vmem:[%s2 + $0x18] sm:$0xff]
  %v539 = vsel %vm39, %v531, 0
  %541 = vmatpush.msra.mxu0 0.0
  %542 = vmatpush.msra.mxu0 0.0
  %543 = vmatpush.msra.mxu0 0.0
  %544 = vmatpush.msra.mxu0 0.0
  %545 = vmatpush.msra.mxu0 0.0
  %546 = vmatpush.msra.mxu0 0.0
  %547 = vmatpush.msra.mxu0 0.0
  %548 = vmatpush.msra.mxu0 0.0
  %549 = vmatpush.msra.mxu0 0.0
  %550 = vmatpush.msra.mxu0 0.0
  %551 = vmatpush.msra.mxu0 0.0
  %552 = vmatpush.msra.mxu0 0.0
  %553 = vmatpush.msra.mxu0 %v538
  %554 = vmatpush.msra.mxu0 %v537
  %555 = vmatpush.msra.mxu0 %v536
  %556 = vmatpush.msra.mxu0 %v535
  %557 = vmatmul.f32.gmra.mxu0 %v539
  %v558 = vpop.f32.mrf.mxu0
  %v559 = vadd.f32 0.0, %v558
  %560 = vdwg.mxu0
  %v561 = vadd.f32 %v534, %v559
  %v562 = vxor.u32 %v561, 2147483648
  %v563 = vmul.f32 %v562, 1.442695
  %v564 = vpow.pop %v563
  %v565 = vadd.f32 %v564, 1.0
  %v566 = vrcp.pop %v565
  %v567 = vmul.f32 %v565, %v566
  %v568 = vsub.f32 1.0, %v567
  %v569 = vmul.f32 %v566, %v568
  %v570 = vadd.f32 %v566, %v569
  %vm571 = vweird.f32 %v565
  %vm572 = vweird.f32 %v566
  %vm573 = vmor %vm571, %vm572
  %v574 = vsel %vm573, %v566, %v570
  %v575 = vand.u32 2147483647, %v565
  %vm576 = vcmp.eq.f32.partialorder %v575, 8.507059e+37
  %v577 = vand.u32 %v565, 2147483648
  %v578 = vor.u32 1.1754944e-38, %v577
  %v579 = vsel %vm576, %v578, %v574
  %v580 = vmul.f32 1.0, %v579
  %v581 = vtanh.pop %v561
  %v582 = vmul.f32 %v580, %v522
  %584 = vrot.lane.b32.xlu0 %v581, 96
  %v585 = vpop.permute.xlu0 %584
  %v587 = vmul.f32 %v580, %v585
  %589 = vrot.lane.b32.xlu0 %v587, 96
  %v590 = vpop.permute.xlu0 %589
  %v592 = vadd.f32 %v582, %v590
  %v593 = vtanh.pop %v592
  %595 = vrot.lane.b32.xlu0 %v593, 96
  %v596 = vpop.permute.xlu0 %595
  %v598 = vmul.f32 %v580, %v596
  %600 = vrot.lane.b32.xlu0 %v598, 32
  %v601 = vpop.permute.xlu0 %600
  %603 = vst.msk [vmem:[#allocation3 + $0x30] sm:$0xff] %vm39, %v601
  %v604 = vld [vmem:[#allocation2 + $0x38] sm:$0xff]
  %v605 = vld [vmem:[%s2] sm:$0xff]
  %v606 = vld [vmem:[%s2 + $0x8] sm:$0xff]
  %v607 = vld [vmem:[%s2 + $0x10] sm:$0xff]
  %v608 = vld [vmem:[%s2 + $0x18] sm:$0xff]
  %v609 = vsel %vm39, %v601, 0
  %611 = vmatpush.msra.mxu0 0.0
  %612 = vmatpush.msra.mxu0 0.0
  %613 = vmatpush.msra.mxu0 0.0
  %614 = vmatpush.msra.mxu0 0.0
  %615 = vmatpush.msra.mxu0 0.0
  %616 = vmatpush.msra.mxu0 0.0
  %617 = vmatpush.msra.mxu0 0.0
  %618 = vmatpush.msra.mxu0 0.0
  %619 = vmatpush.msra.mxu0 0.0
  %620 = vmatpush.msra.mxu0 0.0
  %621 = vmatpush.msra.mxu0 0.0
  %622 = vmatpush.msra.mxu0 0.0
  %623 = vmatpush.msra.mxu0 %v608
  %624 = vmatpush.msra.mxu0 %v607
  %625 = vmatpush.msra.mxu0 %v606
  %626 = vmatpush.msra.mxu0 %v605
  %627 = vmatmul.f32.gmra.mxu0 %v609
  %v628 = vpop.f32.mrf.mxu0
  %v629 = vadd.f32 0.0, %v628
  %630 = vdwg.mxu0
  %v631 = vadd.f32 %v604, %v629
  %v632 = vxor.u32 %v631, 2147483648
  %v633 = vmul.f32 %v632, 1.442695
  %v634 = vpow.pop %v633
  %v635 = vadd.f32 %v634, 1.0
  %v636 = vrcp.pop %v635
  %v637 = vmul.f32 %v635, %v636
  %v638 = vsub.f32 1.0, %v637
  %v639 = vmul.f32 %v636, %v638
  %v640 = vadd.f32 %v636, %v639
  %vm641 = vweird.f32 %v635
  %vm642 = vweird.f32 %v636
  %vm643 = vmor %vm641, %vm642
  %v644 = vsel %vm643, %v636, %v640
  %v645 = vand.u32 2147483647, %v635
  %vm646 = vcmp.eq.f32.partialorder %v645, 8.507059e+37
  %v647 = vand.u32 %v635, 2147483648
  %v648 = vor.u32 1.1754944e-38, %v647
  %v649 = vsel %vm646, %v648, %v644
  %v650 = vmul.f32 1.0, %v649
  %v651 = vtanh.pop %v631
  %v652 = vmul.f32 %v650, %v592
  %654 = vrot.lane.b32.xlu0 %v651, 96
  %v655 = vpop.permute.xlu0 %654
  %v657 = vmul.f32 %v650, %v655
  %659 = vrot.lane.b32.xlu0 %v657, 96
  %v660 = vpop.permute.xlu0 %659
  %v662 = vadd.f32 %v652, %v660
  %v663 = vtanh.pop %v662
  %665 = vrot.lane.b32.xlu0 %v663, 96
  %v666 = vpop.permute.xlu0 %665
  %v668 = vmul.f32 %v650, %v666
  %670 = vrot.lane.b32.xlu0 %v668, 32
  %v671 = vpop.permute.xlu0 %670
  %673 = vst.msk [vmem:[#allocation3 + $0x38] sm:$0xff] %vm39, %v671
  %v674 = vld [vmem:[#allocation3] sm:$0xff]
  %v675 = vld [vmem:[#allocation3 + $0x8] sm:$0xff]
  %v676 = vld [vmem:[#allocation3 + $0x10] sm:$0xff]
  %v677 = vld [vmem:[#allocation3 + $0x18] sm:$0xff]
  %v678 = vld [vmem:[#allocation3 + $0x20] sm:$0xff]
  %v679 = vld [vmem:[#allocation3 + $0x28] sm:$0xff]
  %v680 = vld [vmem:[#allocation3 + $0x30] sm:$0xff]
  %v681 = vld [vmem:[#allocation3 + $0x38] sm:$0xff]
  %v682 = vld [vmem:[%s4] sm:$0xff]
  %v683 = vld [vmem:[%s4 + $0x8] sm:$0xff]
  %v684 = vld [vmem:[%s4 + $0x10] sm:$0xff]
  %v685 = vld [vmem:[%s4 + $0x18] sm:$0xff]
  %v686 = vld [vmem:[%s5] sm:$0x1]
  %v688 = vperm.slane %v686, 0
  %v691 = vsel %vm39, %v674, 0
  %v694 = vsel %vm39, %v675, 0
  %v697 = vsel %vm39, %v676, 0
  %v700 = vsel %vm39, %v677, 0
  %v703 = vsel %vm39, %v678, 0
  %v706 = vsel %vm39, %v679, 0
  %v709 = vsel %vm39, %v680, 0
  %v712 = vsel %vm39, %v681, 0
  %714 = vmatpush.msra.mxu0 0.0
  %715 = vmatpush.msra.mxu0 0.0
  %716 = vmatpush.msra.mxu0 0.0
  %717 = vmatpush.msra.mxu0 0.0
  %718 = vmatpush.msra.mxu0 0.0
  %719 = vmatpush.msra.mxu0 0.0
  %720 = vmatpush.msra.mxu0 0.0
  %721 = vmatpush.msra.mxu0 0.0
  %722 = vmatpush.msra.mxu0 0.0
  %723 = vmatpush.msra.mxu0 0.0
  %724 = vmatpush.msra.mxu0 0.0
  %725 = vmatpush.msra.mxu0 0.0
  %726 = vmatpush.msra.mxu0 %v685
  %727 = vmatpush.msra.mxu0 %v684
  %728 = vmatpush.msra.mxu0 %v683
  %729 = vmatpush.msra.mxu0 %v682
  %730 = vmatmul.f32.gmra.mxu0 %v691
  %v731 = vpop.f32.mrf.mxu0
  %v732 = vadd.f32 %v688, %v731
  %733 = vmatmul.f32.gmra.mxu0 %v694
  %v734 = vpop.f32.mrf.mxu0
  %v735 = vadd.f32 %v688, %v734
  %736 = vmatmul.f32.gmra.mxu0 %v697
  %v737 = vpop.f32.mrf.mxu0
  %v738 = vadd.f32 %v688, %v737
  %739 = vmatmul.f32.gmra.mxu0 %v700
  %v740 = vpop.f32.mrf.mxu0
  %v741 = vadd.f32 %v688, %v740
  %742 = vmatmul.f32.gmra.mxu0 %v703
  %v743 = vpop.f32.mrf.mxu0
  %v744 = vadd.f32 %v688, %v743
  %745 = vmatmul.f32.gmra.mxu0 %v706
  %v746 = vpop.f32.mrf.mxu0
  %v747 = vadd.f32 %v688, %v746
  %748 = vmatmul.f32.gmra.mxu0 %v709
  %v749 = vpop.f32.mrf.mxu0
  %v750 = vadd.f32 %v688, %v749
  %751 = vmatmul.f32.gmra.mxu0 %v712
  %v752 = vpop.f32.mrf.mxu0
  %v753 = vadd.f32 %v688, %v752
  %754 = vdwg.mxu0
  %vm755 = vcmask 130048
  %756 = vst.msk [vmem:[%s6] sm:$0xff] %vm755, %v732
  %757 = vst.msk [vmem:[%s6 + $0x8] sm:$0xff] %vm755, %v735
  %758 = vst.msk [vmem:[%s6 + $0x10] sm:$0xff] %vm755, %v738
  %759 = vst.msk [vmem:[%s6 + $0x18] sm:$0xff] %vm755, %v741
  %760 = vst.msk [vmem:[%s6 + $0x20] sm:$0xff] %vm755, %v744
  %761 = vst.msk [vmem:[%s6 + $0x28] sm:$0xff] %vm755, %v747
  %762 = vst.msk [vmem:[%s6 + $0x30] sm:$0xff] %vm755, %v750
  %763 = vst.msk [vmem:[%s6 + $0x38] sm:$0xff] %vm755, %v753
  // Predicated region
  $region26: #{tpu_custom_call.1} parent=0 // pred_check
    _
  $region27: #{tpu_custom_call.1} parent=0 // pred_check_branch
    %765 = sbr.rel (0) target = $region29
  $region28: #{tpu_custom_call.1} parent=0 // pred_region
    _
  $region29: #{tpu_custom_call.1} parent=0 // pred_fallthru
    _
  // Predicated region
  $region30: #{tpu_custom_call.1} parent=0 // pred_check
    _
  $region31: #{tpu_custom_call.1} parent=0 // pred_check_branch
    %767 = sbr.rel (0) target = $region33
  $region32: #{tpu_custom_call.1} parent=0 // pred_region
    _
  $region33: #{tpu_custom_call.1} parent=0 // pred_fallthru
    _

</llo_original>
